<compile_context>
chip_gen: v5e
topology: v5e:2x2
jax: 0.10.0
libtpu: 0.0.40
codegen_flags: <defaults>
</compile_context>

<pallas_src>
import functools

import jax
import jax.numpy as jnp
from jax.experimental import pallas as pl
from jax.experimental.pallas import tpu as pltpu


def _reid_loss_kernel(feats_ref, t_row_ref, t_col_ref, logits_ref,
                      trip_ref, m_out_ref, s_out_ref, sumlog_out_ref, tgt_out_ref,
                      m_sc, s_sc, sumlog_sc, tgt_sc,
                      *, margin, num_classes, c_tile, num_c_tiles,
                      tiles_per_split, n_split):
    c = pl.program_id(0)                  # C-split (parallel across TCs on v7x)
    k = pl.program_id(1)                  # C-tile within the split (reduction)
    B = m_sc.shape[0]
    split_stride = num_c_tiles - tiles_per_split
    tile_idx = c * split_stride + k       # global C-tile index (scalar)
    tile_start = tile_idx * c_tile        # global column offset (scalar)

    needs_mask = (num_classes % c_tile) != 0                   # static
    has_overlap = (n_split * tiles_per_split) > num_c_tiles    # static (odd #tiles)

    # ---- per-split step 0: reset online-LSE accumulators ---------------------
    @pl.when(k == 0)
    def _():
        m_sc[...] = jnp.full_like(m_sc, -jnp.inf)
        s_sc[...] = jnp.zeros_like(s_sc)
        sumlog_sc[...] = jnp.zeros_like(sumlog_sc)
        tgt_sc[...] = jnp.zeros_like(tgt_sc)

    # ---- triplet branch: once, on split 0, overlapped with the logits DMA ----
    @pl.when((k == 0) & (c == 0))
    def _():
        feats = feats_ref[...].astype(jnp.float32)                     # (B, D)
        inv_norm = jax.lax.rsqrt(                                      # EUP
            jnp.sum(feats * feats, axis=-1, keepdims=True) + 1e-24)
        fn = feats * inv_norm
        gram = jax.lax.dot_general(fn, fn, (((1,), (1,)), ((), ())),
                                   preferred_element_type=jnp.float32)  # (B, B) f32
        # ||a - b||^2 = 2 - 2<a, b> for unit vectors (clamp matches torch's 1e-12).
        dist = jnp.sqrt(jnp.maximum(2.0 - 2.0 * gram, 1e-12))
        is_pos = t_col_ref[...] == t_row_ref[...]                      # (B, B)
        dist_ap = jnp.max(jnp.where(is_pos, dist, -jnp.inf),
                          axis=-1, keepdims=True)                      # (B, 1)
        dist_an = jnp.min(jnp.where(is_pos, jnp.inf, dist),
                          axis=-1, keepdims=True)                      # (B, 1)
        hard = jnp.maximum(dist_ap - dist_an + margin, 0.0)
        trip_ref[0] = jnp.sum(hard, axis=0, keepdims=True) / B         # (1, 1)

    @pl.when((k == 0) & (c > 0))
    def _():
        trip_ref[0] = jnp.zeros((1, 1), jnp.float32)

    # ---- streamed accumulation over one (B, c_tile) logits slab --------------
    def accumulate(masked):
        logit_t = logits_ref[...].astype(jnp.float32)                  # widen in-reg
        col = jax.lax.broadcasted_iota(jnp.int32, logit_t.shape, 1)    # tile-local
        if masked:                       # only the partial last tile pays for this
            valid = col < (num_classes - tile_start)
            x = jnp.where(valid, logit_t, -jnp.inf)
            lg = jnp.where(valid, logit_t, 0.0)
        else:                            # full tile: no per-element masking
            x = logit_t
            lg = logit_t
        on_tgt = col == (t_col_ref[...] - tile_start)                  # (B, Ct)
        m_new = jnp.maximum(m_sc[...], jnp.max(x, axis=-1, keepdims=True))
        alpha = jnp.exp(m_sc[...] - m_new)
        p = jnp.exp(x - m_new)
        s_sc[...] = s_sc[...] * alpha + jnp.sum(p, axis=-1, keepdims=True)
        m_sc[...] = m_new
        sumlog_sc[...] += jnp.sum(lg, axis=-1, keepdims=True)
        tgt_sc[...] += jnp.sum(jnp.where(on_tgt, logit_t, 0.0),
                               axis=-1, keepdims=True)

    def step():
        if needs_mask:
            is_partial = tile_idx == (num_c_tiles - 1)

            @pl.when(is_partial)
            def _():
                accumulate(True)

            @pl.when(jnp.logical_not(is_partial))
            def _():
                accumulate(False)
        else:
            accumulate(False)

    if has_overlap:
        # With an odd tile count, split c>0 re-visits split 0's last tile at k==0.
        @pl.when(jnp.logical_not((c > 0) & (k == 0)))
        def _():
            step()
    else:
        step()

    # ---- per-split finalize: publish partial accumulators --------------------
    @pl.when(k == tiles_per_split - 1)
    def _():
        m_out_ref[0] = m_sc[...]
        s_out_ref[0] = s_sc[...]
        sumlog_out_ref[0] = sumlog_sc[...]
        tgt_out_ref[0] = tgt_sc[...]


def _vmem_capacity_bytes(default=128 * 1024 * 1024):
    try:
        info = pltpu.get_tpu_info()
        return int(getattr(info, "vmem_capacity_bytes", default))
    except Exception:
        return default


def _pick_c_tile(C, B, src_itemsize, vmem_cap):
    """Lane-aligned C tile: big enough to amortize per-step overhead (multi-MiB
    source buffer), small enough for VMEM (2x-buffered source + ~3 f32-widened
    temporaries), generation-aware (v7x has 64 MiB VMEM/TC vs 128 MiB v5e/v6e)."""
    small_vmem = vmem_cap <= 96 * 1024 * 1024            # v7x-class
    src_target = (3 << 20) if small_vmem else (6 << 20)  # source bytes per buffer
    budget = (18 << 20) if small_vmem else (40 << 20)    # total streaming budget
    per_col = B * (2 * src_itemsize + 3 * 4)             # 2x src bufs + f32 temps
    cols = min(src_target // max(1, B * src_itemsize), budget // max(1, per_col))
    cols = max(128, (cols // 128) * 128)
    if C <= cols:
        return int(C)                                    # single full-extent tile
    return int(cols)


def reid_loss(feats, logits, target, *, margin=0.3, epsilon=0.1,
              c_tile=None, n_split=None):
    """ReIDLoss.forward with sam_mode='none' (or sam=False):
       CrossEntropyLabelSmooth(logits, target) + TripletLoss(feats, target)[0]."""
    B, D = feats.shape
    Bl, C = logits.shape
    assert B == Bl
    src_itemsize = jnp.dtype(logits.dtype).itemsize
    feat_itemsize = jnp.dtype(feats.dtype).itemsize
    vmem_cap = _vmem_capacity_bytes()

    if c_tile is None:
        c_tile = _pick_c_tile(C, B, src_itemsize, vmem_cap)
    assert c_tile == C or c_tile % 128 == 0
    num_c_tiles = pl.cdiv(C, c_tile)

    # Split the C reduction across a leading parallel axis (2 TCs on v7x);
    # on 1-TC chips the extra axis just runs sequentially (negligible cost).
    if n_split is None:
        n_split = 2 if num_c_tiles >= 2 else 1
    n_split = int(max(1, min(n_split, num_c_tiles)))
    tiles_per_split = pl.cdiv(num_c_tiles, n_split)
    split_stride = num_c_tiles - tiles_per_split

    t_row = target.astype(jnp.int32).reshape(1, B)
    t_col = target.astype(jnp.int32).reshape(B, 1)

    kernel = functools.partial(
        _reid_loss_kernel, margin=margin, num_classes=C, c_tile=c_tile,
        num_c_tiles=num_c_tiles, tiles_per_split=tiles_per_split, n_split=n_split)

    out_shape = (
        jax.ShapeDtypeStruct((n_split, 1, 1), jnp.float32),   # triplet term
        jax.ShapeDtypeStruct((n_split, B, 1), jnp.float32),   # partial running max
        jax.ShapeDtypeStruct((n_split, B, 1), jnp.float32),   # partial sum exp(x-m)
        jax.ShapeDtypeStruct((n_split, B, 1), jnp.float32),   # partial sum logits
        jax.ShapeDtypeStruct((n_split, B, 1), jnp.float32),   # partial logit[target]
    )

    grid_spec = pltpu.PrefetchScalarGridSpec(
        num_scalar_prefetch=0,
        grid=(n_split, tiles_per_split),
        in_specs=[
            pl.BlockSpec((B, D), lambda c, k: (0, 0)),       # feats (resident)
            pl.BlockSpec((1, B), lambda c, k: (0, 0)),       # target, lane layout
            pl.BlockSpec((B, 1), lambda c, k: (0, 0)),       # target, sublane layout
            pl.BlockSpec((B, c_tile),
                         lambda c, k: (0, c * split_stride + k)),  # logits stream
        ],
        out_specs=[
            pl.BlockSpec((1, 1, 1), lambda c, k: (c, 0, 0)),
            pl.BlockSpec((1, B, 1), lambda c, k: (c, 0, 0)),
            pl.BlockSpec((1, B, 1), lambda c, k: (c, 0, 0)),
            pl.BlockSpec((1, B, 1), lambda c, k: (c, 0, 0)),
            pl.BlockSpec((1, B, 1), lambda c, k: (c, 0, 0)),
        ],
        scratch_shapes=[pltpu.VMEM((B, 1), jnp.float32) for _ in range(4)],
    )

    est_vmem = (2 * B * c_tile * src_itemsize       # double-buffered logits tile
                + 3 * B * c_tile * 4                # f32-widened temporaries
                + 2 * B * D * feat_itemsize         # feats (double-buffered)
                + (2 << 20))                        # scratch / outputs / slack
    vmem_limit = int(min(max(vmem_cap - (4 << 20), 16 << 20),
                         max(32 << 20, est_vmem + (8 << 20))))

    cost = pl.CostEstimate(
        flops=int(2 * B * B * D + 9 * B * C),
        transcendentals=int(B * C + B * B),
        bytes_accessed=int(B * C * src_itemsize + B * D * feat_itemsize
                           + 2 * B * 4 + n_split * (4 * B + 1) * 4),
    )

    trip, m_p, s_p, sumlog_p, tgt_p = pl.pallas_call(
        kernel,
        out_shape=out_shape,
        grid_spec=grid_spec,
        compiler_params=pltpu.CompilerParams(
            dimension_semantics=("parallel", "arbitrary"),
            vmem_limit_bytes=vmem_limit),
        cost_estimate=cost,
    )(feats, t_row, t_col, logits)

    # Tiny JAX epilogue: merge per-split online-LSE partials + fused smoothing:
    #   row_ce = lse - (1-eps)*logit[tgt] - (eps/C)*sum_j logit_j
    m_glob = jnp.max(m_p, axis=0)                               # (B, 1)
    s_glob = jnp.sum(s_p * jnp.exp(m_p - m_glob), axis=0)       # (B, 1)
    lse = m_glob + jnp.log(s_glob)
    sum_logits = jnp.sum(sumlog_p, axis=0)
    tgt_logit = jnp.sum(tgt_p, axis=0)
    ce_rows = lse - (1.0 - epsilon) * tgt_logit - (epsilon / C) * sum_logits
    return jnp.mean(ce_rows) + trip[0, 0, 0]


def _reference(feats, logits, target, margin=0.3, epsilon=0.1):
    """Pure-JAX reference faithful to the PyTorch math (correctness check)."""
    feats = feats.astype(jnp.float32)
    logits = logits.astype(jnp.float32)
    B, _ = feats.shape
    C = logits.shape[1]

    fn = feats / (jnp.linalg.norm(feats, axis=-1, keepdims=True) + 1e-12)
    sq = jnp.sum(fn * fn, axis=-1, keepdims=True)
    dist = sq + sq.T - 2.0 * fn @ fn.T
    dist = jnp.sqrt(jnp.maximum(dist, 1e-12))
    is_pos = target[:, None] == target[None, :]
    dist_ap = jnp.max(jnp.where(is_pos, dist, -jnp.inf), axis=-1)
    dist_an = jnp.min(jnp.where(is_pos, jnp.inf, dist), axis=-1)
    triplet = jnp.mean(jnp.maximum(dist_ap - dist_an + margin, 0.0))

    log_probs = jax.nn.log_softmax(logits, axis=-1)
    one_hot = jax.nn.one_hot(target, C, dtype=jnp.float32)
    smooth = (1.0 - epsilon) * one_hot + epsilon / C
    ce = jnp.sum(jnp.mean(-smooth * log_probs, axis=0))
    return ce + triplet


def _make_inputs(key, B, D, C, dtype):
    k1, k2 = jax.random.split(key)
    feats = jax.random.normal(k1, (B, D), dtype=jnp.float32).astype(dtype)
    logits = (3.0 * jax.random.normal(k2, (B, C), dtype=jnp.float32)).astype(dtype)
    target = (jnp.arange(B, dtype=jnp.int32) // 4) % C   # K=4 instances / identity
    return feats, logits, target


if __name__ == "__main__":
    cases = [
        # single full-extent tile, no split
        dict(B=8,  D=32,  C=16,  dtype=jnp.float32,  c_tile=None, tol=3e-4),
        # 4 tiles -> 2-way split, even, no masking anywhere
        dict(B=8,  D=32,  C=512, dtype=jnp.float32,  c_tile=128,  tol=3e-4),
        # 3 tiles -> split with overlap skip + masked partial last tile
        dict(B=16, D=64,  C=328, dtype=jnp.float32,  c_tile=128,  tol=3e-4),
        # 3 tiles -> overlap skip, but no masking (C % c_tile == 0)
        dict(B=16, D=32,  C=384, dtype=jnp.float32,  c_tile=128,  tol=3e-4),
        # bf16 streaming, masked last tile, larger D for the f32 Gram path
        dict(B=8,  D=256, C=200, dtype=jnp.bfloat16, c_tile=128,  tol=2e-3),
    ]
    for i, cs in enumerate(cases):
        key = jax.random.fold_in(jax.random.PRNGKey(0), i)
        feats, logits, target = _make_inputs(key, cs["B"], cs["D"], cs["C"],
                                             cs["dtype"])
        out = jax.block_until_ready(
            reid_loss(feats, logits, target, margin=0.3, epsilon=0.1,
                      c_tile=cs["c_tile"]))
        ref = jax.block_until_ready(_reference(feats, logits, target))
        assert jnp.allclose(out, ref, atol=cs["tol"], rtol=cs["tol"]), (i, out, ref)

    print("KERNEL_OK")
</pallas_src>

<mosaic_0001>
module attributes {stable_mosaic.version = 11 : i64} {
  func.func @_reid_loss_kernel(%arg0: i32, %arg1: i32, %arg2: memref<8x32xf32, #tpu.memory_space<vmem>>, %arg3: memref<1x8xi32, #tpu.memory_space<vmem>>, %arg4: memref<8x1xi32, #tpu.memory_space<vmem>>, %arg5: memref<8x16xf32, #tpu.memory_space<vmem>>, %arg6: memref<1x1x1xf32, #tpu.memory_space<vmem>>, %arg7: memref<1x8x1xf32, #tpu.memory_space<vmem>>, %arg8: memref<1x8x1xf32, #tpu.memory_space<vmem>>, %arg9: memref<1x8x1xf32, #tpu.memory_space<vmem>>, %arg10: memref<1x8x1xf32, #tpu.memory_space<vmem>>, %arg11: memref<8x1xf32, #tpu.memory_space<vmem>>, %arg12: memref<8x1xf32, #tpu.memory_space<vmem>>, %arg13: memref<8x1xf32, #tpu.memory_space<vmem>>, %arg14: memref<8x1xf32, #tpu.memory_space<vmem>>) attributes {dimension_semantics = [#tpu.dimension_semantics<parallel>, #tpu.dimension_semantics<arbitrary>], iteration_bounds = array<i64: 1, 1>, scalar_prefetch = 0 : i64, scratch_operands = 4 : i64, tpu.core_type = #tpu.core_type<tc>, window_params = [{pipeline_mode = #tpu.pipeline_mode<synchronous>, transform_indices = @transform_0, window_bounds = array<i64: 8, 32>}, {pipeline_mode = #tpu.pipeline_mode<synchronous>, transform_indices = @transform_1, window_bounds = array<i64: 1, 8>}, {pipeline_mode = #tpu.pipeline_mode<synchronous>, transform_indices = @transform_2, window_bounds = array<i64: 8, 1>}, {transform_indices = @transform_3, window_bounds = array<i64: 8, 16>}, {transform_indices = @transform_4, window_bounds = array<i64: 1, 1, 1>}, {transform_indices = @transform_5, window_bounds = array<i64: 1, 8, 1>}, {transform_indices = @transform_6, window_bounds = array<i64: 1, 8, 1>}, {transform_indices = @transform_7, window_bounds = array<i64: 1, 8, 1>}, {transform_indices = @transform_8, window_bounds = array<i64: 1, 8, 1>}]} {
    %c0_i32 = arith.constant 0 : i32
    %0 = arith.muli %arg0, %c0_i32 : i32
    %1 = arith.addi %0, %arg1 : i32
    %c16_i32 = arith.constant 16 : i32
    %2 = arith.muli %1, %c16_i32 : i32
    %c0_i32_0 = arith.constant 0 : i32
    %3 = arith.cmpi eq, %arg1, %c0_i32_0 : i32
    %4 = arith.extui %3 : i1 to i32
    %c0_i32_1 = arith.constant 0 : i32
    %5 = arith.cmpi ne, %4, %c0_i32_1 : i32
    scf.if %5 {
      %cst_35 = arith.constant 0xFF800000 : f32
      %55 = vector.broadcast %cst_35 : f32 to vector<8x1xf32>
      %c0_36 = arith.constant 0 : index
      %c0_37 = arith.constant 0 : index
      %56 = vector.load %arg11[%c0_36, %c0_37] : memref<8x1xf32, #tpu.memory_space<vmem>>, vector<8x1xf32>
      tpu.vector_store %arg11[%c0_36, %c0_37], %55 {strides = array<i32>} : memref<8x1xf32, #tpu.memory_space<vmem>>, vector<8x1xf32>,
      %cst_38 = arith.constant 0.000000e+00 : f32
      %57 = vector.broadcast %cst_38 : f32 to vector<8x1xf32>
      %c0_39 = arith.constant 0 : index
      %c0_40 = arith.constant 0 : index
      %58 = vector.load %arg12[%c0_39, %c0_40] : memref<8x1xf32, #tpu.memory_space<vmem>>, vector<8x1xf32>
      tpu.vector_store %arg12[%c0_39, %c0_40], %57 {strides = array<i32>} : memref<8x1xf32, #tpu.memory_space<vmem>>, vector<8x1xf32>,
      %cst_41 = arith.constant 0.000000e+00 : f32
      %59 = vector.broadcast %cst_41 : f32 to vector<8x1xf32>
      %c0_42 = arith.constant 0 : index
      %c0_43 = arith.constant 0 : index
      %60 = vector.load %arg13[%c0_42, %c0_43] : memref<8x1xf32, #tpu.memory_space<vmem>>, vector<8x1xf32>
      tpu.vector_store %arg13[%c0_42, %c0_43], %59 {strides = array<i32>} : memref<8x1xf32, #tpu.memory_space<vmem>>, vector<8x1xf32>,
      %cst_44 = arith.constant 0.000000e+00 : f32
      %61 = vector.broadcast %cst_44 : f32 to vector<8x1xf32>
      %c0_45 = arith.constant 0 : index
      %c0_46 = arith.constant 0 : index
      %62 = vector.load %arg14[%c0_45, %c0_46] : memref<8x1xf32, #tpu.memory_space<vmem>>, vector<8x1xf32>
      tpu.vector_store %arg14[%c0_45, %c0_46], %61 {strides = array<i32>} : memref<8x1xf32, #tpu.memory_space<vmem>>, vector<8x1xf32>,
    } else {
    }
    %c0_i32_2 = arith.constant 0 : i32
    %6 = arith.cmpi eq, %arg1, %c0_i32_2 : i32
    %c0_i32_3 = arith.constant 0 : i32
    %7 = arith.cmpi eq, %arg0, %c0_i32_3 : i32
    %8 = arith.andi %6, %7 : i1
    %9 = arith.extui %8 : i1 to i32
    %c0_i32_4 = arith.constant 0 : i32
    %10 = arith.cmpi ne, %9, %c0_i32_4 : i32
    scf.if %10 {
      %c0_35 = arith.constant 0 : index
      %c0_36 = arith.constant 0 : index
      %55 = vector.load %arg2[%c0_35, %c0_36] : memref<8x32xf32, #tpu.memory_space<vmem>>, vector<8x32xf32>
      %56 = arith.mulf %55, %55 : vector<8x32xf32>
      %cst_37 = arith.constant dense<0.000000e+00> : vector<8xf32>
      %57 = vector.multi_reduction <add>, %56, %cst_37 [1] : vector<8x32xf32> to vector<8xf32>
      %58 = vector.shape_cast %57 : vector<8xf32> to vector<8x1xf32>
      %cst_38 = arith.constant 1.000000e-24 : f32
      %59 = vector.broadcast %cst_38 : f32 to vector<8x1xf32>
      %60 = arith.addf %58, %59 : vector<8x1xf32>
      %61 = math.rsqrt %60 : vector<8x1xf32>
      %62 = vector.broadcast %61 : vector<8x1xf32> to vector<8x32xf32>
      %63 = arith.mulf %55, %62 : vector<8x32xf32>
      %cst_39 = arith.constant dense<0.000000e+00> : vector<8x8xf32>
      %64 = tpu.matmul %63, %63, %cst_39 {dimension_numbers = #tpu.dot_dimension_numbers<[1], [1], [0], [0], [0, 0, 1, 0], [], []>} : vector<8x32xf32>, vector<8x32xf32>, vector<8x8xf32> -> vector<8x8xf32>
      %cst_40 = arith.constant 2.000000e+00 : f32
      %65 = vector.broadcast %cst_40 : f32 to vector<8x8xf32>
      %66 = arith.mulf %65, %64 : vector<8x8xf32>
      %cst_41 = arith.constant 2.000000e+00 : f32
      %67 = vector.broadcast %cst_41 : f32 to vector<8x8xf32>
      %68 = arith.subf %67, %66 : vector<8x8xf32>
      %cst_42 = arith.constant 9.99999996E-13 : f32
      %69 = vector.broadcast %cst_42 : f32 to vector<8x8xf32>
      %70 = arith.maximumf %68, %69 : vector<8x8xf32>
      %71 = math.sqrt %70 : vector<8x8xf32>
      %c0_43 = arith.constant 0 : index
      %c0_44 = arith.constant 0 : index
      %72 = vector.load %arg4[%c0_43, %c0_44] : memref<8x1xi32, #tpu.memory_space<vmem>>, vector<8x1xi32>
      %c0_45 = arith.constant 0 : index
      %c0_46 = arith.constant 0 : index
      %73 = vector.load %arg3[%c0_45, %c0_46] : memref<1x8xi32, #tpu.memory_space<vmem>>, vector<1x8xi32>
      %74 = vector.broadcast %72 : vector<8x1xi32> to vector<8x8xi32>
      %75 = vector.broadcast %73 : vector<1x8xi32> to vector<8x8xi32>
      %76 = arith.cmpi eq, %74, %75 : vector<8x8xi32>
      %cst_47 = arith.constant 0xFF800000 : f32
      %77 = vector.broadcast %cst_47 : f32 to vector<8x8xf32>
      %78 = arith.select %76, %71, %77 : vector<8x8xi1>, vector<8x8xf32>
      %cst_48 = arith.constant dense<0xFF800000> : vector<8xf32>
      %79 = vector.multi_reduction <maximumf>, %78, %cst_48 [1] : vector<8x8xf32> to vector<8xf32>
      %80 = vector.shape_cast %79 : vector<8xf32> to vector<8x1xf32>
      %cst_49 = arith.constant 0x7F800000 : f32
      %81 = vector.broadcast %cst_49 : f32 to vector<8x8xf32>
      %82 = arith.select %76, %81, %71 : vector<8x8xi1>, vector<8x8xf32>
      %cst_50 = arith.constant dense<0x7F800000> : vector<8xf32>
      %83 = vector.multi_reduction <minimumf>, %82, %cst_50 [1] : vector<8x8xf32> to vector<8xf32>
      %84 = vector.shape_cast %83 : vector<8xf32> to vector<8x1xf32>
      %85 = arith.subf %80, %84 : vector<8x1xf32>
      %cst_51 = arith.constant 3.000000e-01 : f32
      %86 = vector.broadcast %cst_51 : f32 to vector<8x1xf32>
      %87 = arith.addf %85, %86 : vector<8x1xf32>
      %cst_52 = arith.constant 0.000000e+00 : f32
      %88 = vector.broadcast %cst_52 : f32 to vector<8x1xf32>
      %89 = arith.maximumf %87, %88 : vector<8x1xf32>
      %cst_53 = arith.constant dense<0.000000e+00> : vector<1xf32>
      %90 = vector.multi_reduction <add>, %89, %cst_53 [0] : vector<8x1xf32> to vector<1xf32>
      %91 = vector.shape_cast %90 : vector<1xf32> to vector<1x1xf32>
      %cst_54 = arith.constant 8.000000e+00 : f32
      %92 = vector.broadcast %cst_54 : f32 to vector<1x1xf32>
      %93 = arith.divf %91, %92 : vector<1x1xf32>
      %c0_55 = arith.constant 0 : index
      %c0_56 = arith.constant 0 : index
      %c0_57 = arith.constant 0 : index
      %94 = vector.load %arg6[%c0_55, %c0_56, %c0_57] : memref<1x1x1xf32, #tpu.memory_space<vmem>>, vector<1x1x1xf32>
      %95 = vector.shape_cast %94 : vector<1x1x1xf32> to vector<1x1xf32>
      %96 = vector.shape_cast %93 : vector<1x1xf32> to vector<1x1x1xf32>
      tpu.vector_store %arg6[%c0_55, %c0_56, %c0_57], %96 {strides = array<i32>} : memref<1x1x1xf32, #tpu.memory_space<vmem>>, vector<1x1x1xf32>,
    } else {
    }
    %c0_i32_5 = arith.constant 0 : i32
    %11 = arith.cmpi eq, %arg1, %c0_i32_5 : i32
    %c0_i32_6 = arith.constant 0 : i32
    %12 = arith.cmpi sgt, %arg0, %c0_i32_6 : i32
    %13 = arith.andi %11, %12 : i1
    %14 = arith.extui %13 : i1 to i32
    %c0_i32_7 = arith.constant 0 : i32
    %15 = arith.cmpi ne, %14, %c0_i32_7 : i32
    scf.if %15 {
      %cst_35 = arith.constant 0.000000e+00 : f32
      %55 = vector.broadcast %cst_35 : f32 to vector<1x1xf32>
      %c0_36 = arith.constant 0 : index
      %c0_37 = arith.constant 0 : index
      %c0_38 = arith.constant 0 : index
      %56 = vector.load %arg6[%c0_36, %c0_37, %c0_38] : memref<1x1x1xf32, #tpu.memory_space<vmem>>, vector<1x1x1xf32>
      %57 = vector.shape_cast %56 : vector<1x1x1xf32> to vector<1x1xf32>
      %58 = vector.shape_cast %55 : vector<1x1xf32> to vector<1x1x1xf32>
      tpu.vector_store %arg6[%c0_36, %c0_37, %c0_38], %58 {strides = array<i32>} : memref<1x1x1xf32, #tpu.memory_space<vmem>>, vector<1x1x1xf32>,
    } else {
    }
    %c0 = arith.constant 0 : index
    %c0_8 = arith.constant 0 : index
    %16 = vector.load %arg5[%c0, %c0_8] : memref<8x16xf32, #tpu.memory_space<vmem>>, vector<8x16xf32>
    %17 = tpu.iota {dimensions = array<i32: 1>} : vector<8x16xi32>
    %c0_9 = arith.constant 0 : index
    %c0_10 = arith.constant 0 : index
    %18 = vector.load %arg4[%c0_9, %c0_10] : memref<8x1xi32, #tpu.memory_space<vmem>>, vector<8x1xi32>
    %19 = vector.broadcast %2 : i32 to vector<8x1xi32>
    %20 = arith.subi %18, %19 : vector<8x1xi32>
    %21 = vector.broadcast %20 : vector<8x1xi32> to vector<8x16xi32>
    %22 = arith.cmpi eq, %17, %21 : vector<8x16xi32>
    %c0_11 = arith.constant 0 : index
    %c0_12 = arith.constant 0 : index
    %23 = vector.load %arg11[%c0_11, %c0_12] : memref<8x1xf32, #tpu.memory_space<vmem>>, vector<8x1xf32>
    %cst = arith.constant dense<0xFF800000> : vector<8xf32>
    %24 = vector.multi_reduction <maximumf>, %16, %cst [1] : vector<8x16xf32> to vector<8xf32>
    %25 = vector.shape_cast %24 : vector<8xf32> to vector<8x1xf32>
    %26 = arith.maximumf %23, %25 : vector<8x1xf32>
    %c0_13 = arith.constant 0 : index
    %c0_14 = arith.constant 0 : index
    %27 = vector.load %arg11[%c0_13, %c0_14] : memref<8x1xf32, #tpu.memory_space<vmem>>, vector<8x1xf32>
    %28 = arith.subf %27, %26 : vector<8x1xf32>
    %29 = math.exp %28 : vector<8x1xf32>
    %30 = vector.broadcast %26 : vector<8x1xf32> to vector<8x16xf32>
    %31 = arith.subf %16, %30 : vector<8x16xf32>
    %32 = math.exp %31 : vector<8x16xf32>
    %c0_15 = arith.constant 0 : index
    %c0_16 = arith.constant 0 : index
    %33 = vector.load %arg12[%c0_15, %c0_16] : memref<8x1xf32, #tpu.memory_space<vmem>>, vector<8x1xf32>
    %34 = arith.mulf %33, %29 : vector<8x1xf32>
    %cst_17 = arith.constant dense<0.000000e+00> : vector<8xf32>
    %35 = vector.multi_reduction <add>, %32, %cst_17 [1] : vector<8x16xf32> to vector<8xf32>
    %36 = vector.shape_cast %35 : vector<8xf32> to vector<8x1xf32>
    %37 = arith.addf %34, %36 : vector<8x1xf32>
    %c0_18 = arith.constant 0 : index
    %c0_19 = arith.constant 0 : index
    %38 = vector.load %arg12[%c0_18, %c0_19] : memref<8x1xf32, #tpu.memory_space<vmem>>, vector<8x1xf32>
    tpu.vector_store %arg12[%c0_18, %c0_19], %37 {strides = array<i32>} : memref<8x1xf32, #tpu.memory_space<vmem>>, vector<8x1xf32>,
    %c0_20 = arith.constant 0 : index
    %c0_21 = arith.constant 0 : index
    %39 = vector.load %arg11[%c0_20, %c0_21] : memref<8x1xf32, #tpu.memory_space<vmem>>, vector<8x1xf32>
    tpu.vector_store %arg11[%c0_20, %c0_21], %26 {strides = array<i32>} : memref<8x1xf32, #tpu.memory_space<vmem>>, vector<8x1xf32>,
    %c0_22 = arith.constant 0 : index
    %c0_23 = arith.constant 0 : index
    %40 = vector.load %arg13[%c0_22, %c0_23] : memref<8x1xf32, #tpu.memory_space<vmem>>, vector<8x1xf32>
    %cst_24 = arith.constant dense<0.000000e+00> : vector<8xf32>
    %41 = vector.multi_reduction <add>, %16, %cst_24 [1] : vector<8x16xf32> to vector<8xf32>
    %42 = vector.shape_cast %41 : vector<8xf32> to vector<8x1xf32>
    %43 = arith.addf %40, %42 : vector<8x1xf32>
    %c0_25 = arith.constant 0 : index
    %c0_26 = arith.constant 0 : index
    %44 = vector.load %arg13[%c0_25, %c0_26] : memref<8x1xf32, #tpu.memory_space<vmem>>, vector<8x1xf32>
    tpu.vector_store %arg13[%c0_25, %c0_26], %43 {strides = array<i32>} : memref<8x1xf32, #tpu.memory_space<vmem>>, vector<8x1xf32>,
    %c0_27 = arith.constant 0 : index
    %c0_28 = arith.constant 0 : index
    %45 = vector.load %arg14[%c0_27, %c0_28] : memref<8x1xf32, #tpu.memory_space<vmem>>, vector<8x1xf32>
    %cst_29 = arith.constant 0.000000e+00 : f32
    %46 = vector.broadcast %cst_29 : f32 to vector<8x16xf32>
    %47 = arith.select %22, %16, %46 : vector<8x16xi1>, vector<8x16xf32>
    %cst_30 = arith.constant dense<0.000000e+00> : vector<8xf32>
    %48 = vector.multi_reduction <add>, %47, %cst_30 [1] : vector<8x16xf32> to vector<8xf32>
    %49 = vector.shape_cast %48 : vector<8xf32> to vector<8x1xf32>
    %50 = arith.addf %45, %49 : vector<8x1xf32>
    %c0_31 = arith.constant 0 : index
    %c0_32 = arith.constant 0 : index
    %51 = vector.load %arg14[%c0_31, %c0_32] : memref<8x1xf32, #tpu.memory_space<vmem>>, vector<8x1xf32>
    tpu.vector_store %arg14[%c0_31, %c0_32], %50 {strides = array<i32>} : memref<8x1xf32, #tpu.memory_space<vmem>>, vector<8x1xf32>,
    %c0_i32_33 = arith.constant 0 : i32
    %52 = arith.cmpi eq, %arg1, %c0_i32_33 : i32
    %53 = arith.extui %52 : i1 to i32
    %c0_i32_34 = arith.constant 0 : i32
    %54 = arith.cmpi ne, %53, %c0_i32_34 : i32
    scf.if %54 {
      %c0_35 = arith.constant 0 : index
      %c0_36 = arith.constant 0 : index
      %55 = vector.load %arg11[%c0_35, %c0_36] : memref<8x1xf32, #tpu.memory_space<vmem>>, vector<8x1xf32>
      %c0_37 = arith.constant 0 : index
      %c0_38 = arith.constant 0 : index
      %c0_39 = arith.constant 0 : index
      %56 = vector.load %arg7[%c0_37, %c0_38, %c0_39] : memref<1x8x1xf32, #tpu.memory_space<vmem>>, vector<1x8x1xf32>
      %57 = vector.shape_cast %56 : vector<1x8x1xf32> to vector<8x1xf32>
      %58 = vector.shape_cast %55 : vector<8x1xf32> to vector<1x8x1xf32>
      tpu.vector_store %arg7[%c0_37, %c0_38, %c0_39], %58 {strides = array<i32>} : memref<1x8x1xf32, #tpu.memory_space<vmem>>, vector<1x8x1xf32>,
      %c0_40 = arith.constant 0 : index
      %c0_41 = arith.constant 0 : index
      %59 = vector.load %arg12[%c0_40, %c0_41] : memref<8x1xf32, #tpu.memory_space<vmem>>, vector<8x1xf32>
      %c0_42 = arith.constant 0 : index
      %c0_43 = arith.constant 0 : index
      %c0_44 = arith.constant 0 : index
      %60 = vector.load %arg8[%c0_42, %c0_43, %c0_44] : memref<1x8x1xf32, #tpu.memory_space<vmem>>, vector<1x8x1xf32>
      %61 = vector.shape_cast %60 : vector<1x8x1xf32> to vector<8x1xf32>
      %62 = vector.shape_cast %59 : vector<8x1xf32> to vector<1x8x1xf32>
      tpu.vector_store %arg8[%c0_42, %c0_43, %c0_44], %62 {strides = array<i32>} : memref<1x8x1xf32, #tpu.memory_space<vmem>>, vector<1x8x1xf32>,
      %c0_45 = arith.constant 0 : index
      %c0_46 = arith.constant 0 : index
      %63 = vector.load %arg13[%c0_45, %c0_46] : memref<8x1xf32, #tpu.memory_space<vmem>>, vector<8x1xf32>
      %c0_47 = arith.constant 0 : index
      %c0_48 = arith.constant 0 : index
      %c0_49 = arith.constant 0 : index
      %64 = vector.load %arg9[%c0_47, %c0_48, %c0_49] : memref<1x8x1xf32, #tpu.memory_space<vmem>>, vector<1x8x1xf32>
      %65 = vector.shape_cast %64 : vector<1x8x1xf32> to vector<8x1xf32>
      %66 = vector.shape_cast %63 : vector<8x1xf32> to vector<1x8x1xf32>
      tpu.vector_store %arg9[%c0_47, %c0_48, %c0_49], %66 {strides = array<i32>} : memref<1x8x1xf32, #tpu.memory_space<vmem>>, vector<1x8x1xf32>,
      %c0_50 = arith.constant 0 : index
      %c0_51 = arith.constant 0 : index
      %67 = vector.load %arg14[%c0_50, %c0_51] : memref<8x1xf32, #tpu.memory_space<vmem>>, vector<8x1xf32>
      %c0_52 = arith.constant 0 : index
      %c0_53 = arith.constant 0 : index
      %c0_54 = arith.constant 0 : index
      %68 = vector.load %arg10[%c0_52, %c0_53, %c0_54] : memref<1x8x1xf32, #tpu.memory_space<vmem>>, vector<1x8x1xf32>
      %69 = vector.shape_cast %68 : vector<1x8x1xf32> to vector<8x1xf32>
      %70 = vector.shape_cast %67 : vector<8x1xf32> to vector<1x8x1xf32>
      tpu.vector_store %arg10[%c0_52, %c0_53, %c0_54], %70 {strides = array<i32>} : memref<1x8x1xf32, #tpu.memory_space<vmem>>, vector<1x8x1xf32>,
    } else {
    }
    return
  }
  func.func @transform_0(%arg0: i32, %arg1: i32) -> (i32, i32) {
    %c0_i32 = arith.constant 0 : i32
    %c0_i32_0 = arith.constant 0 : i32
    %c0_i32_1 = arith.constant 0 : i32
    return %c0_i32, %c0_i32_0 : i32, i32
  }
  func.func @transform_1(%arg0: i32, %arg1: i32) -> (i32, i32) {
    %c0_i32 = arith.constant 0 : i32
    %c0_i32_0 = arith.constant 0 : i32
    %c0_i32_1 = arith.constant 0 : i32
    return %c0_i32, %c0_i32_0 : i32, i32
  }
  func.func @transform_2(%arg0: i32, %arg1: i32) -> (i32, i32) {
    %c0_i32 = arith.constant 0 : i32
    %c0_i32_0 = arith.constant 0 : i32
    %c0_i32_1 = arith.constant 0 : i32
    return %c0_i32, %c0_i32_0 : i32, i32
  }
  func.func @transform_3(%arg0: i32, %arg1: i32) -> (i32, i32) {
    %c0_i32 = arith.constant 0 : i32
    %0 = arith.muli %arg0, %c0_i32 : i32
    %1 = arith.addi %0, %arg1 : i32
    %c0_i32_0 = arith.constant 0 : i32
    %c0_i32_1 = arith.constant 0 : i32
    return %c0_i32_0, %1 : i32, i32
  }
  func.func @transform_4(%arg0: i32, %arg1: i32) -> (i32, i32, i32) {
    %c0_i32 = arith.constant 0 : i32
    %c0_i32_0 = arith.constant 0 : i32
    %c0_i32_1 = arith.constant 0 : i32
    return %arg0, %c0_i32, %c0_i32_0 : i32, i32, i32
  }
  func.func @transform_5(%arg0: i32, %arg1: i32) -> (i32, i32, i32) {
    %c0_i32 = arith.constant 0 : i32
    %c0_i32_0 = arith.constant 0 : i32
    %c0_i32_1 = arith.constant 0 : i32
    return %arg0, %c0_i32, %c0_i32_0 : i32, i32, i32
  }
  func.func @transform_6(%arg0: i32, %arg1: i32) -> (i32, i32, i32) {
    %c0_i32 = arith.constant 0 : i32
    %c0_i32_0 = arith.constant 0 : i32
    %c0_i32_1 = arith.constant 0 : i32
    return %arg0, %c0_i32, %c0_i32_0 : i32, i32, i32
  }
  func.func @transform_7(%arg0: i32, %arg1: i32) -> (i32, i32, i32) {
    %c0_i32 = arith.constant 0 : i32
    %c0_i32_0 = arith.constant 0 : i32
    %c0_i32_1 = arith.constant 0 : i32
    return %arg0, %c0_i32, %c0_i32_0 : i32, i32, i32
  }
  func.func @transform_8(%arg0: i32, %arg1: i32) -> (i32, i32, i32) {
    %c0_i32 = arith.constant 0 : i32
    %c0_i32_0 = arith.constant 0 : i32
    %c0_i32_1 = arith.constant 0 : i32
    return %arg0, %c0_i32, %c0_i32_0 : i32, i32, i32
  }
}

</mosaic_0001>

<llo_original>
// kernel: tpu_custom_call.1
$region0: #{tpu_custom_call.1}
  #allocation0 [shape = 'u32[]', space=smem, size = 0x4, offset = 0x4, fixed_abs, tag = 'smem constant byte address 0x4 - core index']
  #allocation1 [shape = 'u32[72,128]{1,0:T(1,128)}', space=vmem, size = 0x9000, scoped, tag = 'internal scratch']
  #allocation2 [shape = 'f32[8,1]{1,0:T(8,128)}', space=vmem, size = 0x1000, scoped, tag = 'scratch operand']
  #allocation3 [shape = 'f32[8,1]{1,0:T(8,128)}', space=vmem, size = 0x1000, scoped, tag = 'scratch operand']
  #allocation4 [shape = 'f32[8,1]{1,0:T(8,128)}', space=vmem, size = 0x1000, scoped, tag = 'scratch operand']
  #allocation5 [shape = 'f32[8,1]{1,0:T(8,128)}', space=vmem, size = 0x1000, scoped, tag = 'scratch operand']
  %s0 = inlined_call_operand.vmem [shape: f32[8,32], index: 0, kind: input, shape index: {}]
  %s1 = inlined_call_operand.vmem [shape: s32[1,8], index: 1, kind: input, shape index: {}]
  %s2 = inlined_call_operand.vmem [shape: s32[8,1], index: 2, kind: input, shape index: {}]
  %s3 = inlined_call_operand.hbm [shape: f32[8,16], index: 3, kind: input, shape index: {}]
  %s4 = inlined_call_operand.hbm [shape: f32[1,1,1], index: 4, kind: output, shape index: {0}]
  %s5 = inlined_call_operand.vmem [shape: f32[1,8,1], index: 5, kind: output, shape index: {1}]
  %s6 = inlined_call_operand.vmem [shape: f32[1,8,1], index: 6, kind: output, shape index: {2}]
  %s7 = inlined_call_operand.vmem [shape: f32[1,8,1], index: 7, kind: output, shape index: {3}]
  %s8 = inlined_call_operand.vmem [shape: f32[1,8,1], index: 8, kind: output, shape index: {4}]
  %9 = xla_tuple %s4, %s5, %s6, %s7, %s8
  %s10 = sld [smem:[#allocation0]]
  $region78: #{tpu_custom_call.1} parent=0
    _
  %s12 = ssub.s32 1, %s10
  %s13 = scalar_select 0, %s12, %s10
  $region1: #{tpu_custom_call.1} parent=0
    #allocation6 [shape = 'u8[4096]{0}', space=vmem, size = 0x1000, scoped, tag = 'input window, operand 3, single buffered']
    #allocation7 [shape = 's32[1]{0}', space=sflag, size = 0x4, scoped, tag = 'scoped memory for tpu_custom_call.1']
    #allocation8 [shape = 's32[1]{0}', space=sflag, size = 0x4, scoped, tag = 'scoped memory for tpu_custom_call.1']
    #allocation9 [shape = 'u8[512]{0}', space=vmem, size = 0x400, scoped, tag = 'output window, operand 0, single buffered']
    %14 = vsyncpa [#allocation7], 0
    %15 = vsyncpa [#allocation8], 0
    // Predicated region
    $region2: #{tpu_custom_call.1} parent=1 // pred_check
      _
    $region3: #{tpu_custom_call.1} parent=1 // pred_check_branch
      %17 = sbr.rel (0) target = $region5
    $region4: #{tpu_custom_call.1} parent=1 // pred_region
      _
    $region5: #{tpu_custom_call.1} parent=1 // pred_fallthru
      _
    // Predicated region
    $region6: #{tpu_custom_call.1} parent=1 // pred_check
      _
    $region7: #{tpu_custom_call.1} parent=1 // pred_check_branch
      %19 = sbr.rel (0) target = $region9
    $region8: #{tpu_custom_call.1} parent=1 // pred_region
      _
    $region9: #{tpu_custom_call.1} parent=1 // pred_fallthru
      _
    // Predicated region
    $region10: #{tpu_custom_call.1} parent=1 // pred_check
      _
    $region11: #{tpu_custom_call.1} parent=1 // pred_check_branch
      %21 = sbr.rel (0) target = $region13
    $region12: #{tpu_custom_call.1} parent=1 // pred_region
      _
    $region13: #{tpu_custom_call.1} parent=1 // pred_fallthru
      _
    // Predicated region
    $region14: #{tpu_custom_call.1} parent=1 // pred_check
      _
    $region15: #{tpu_custom_call.1} parent=1 // pred_check_branch
      %23 = sbr.rel (0) target = $region17
    $region16: #{tpu_custom_call.1} parent=1 // pred_region
      %25 = vsyncadd [#allocation7], 0
      %s27 = sshll.u32 %s3, 4
      %s28 = int_to_ptr.hbm [resolvable:$true] %s27
      %s29 = sshll.u32 [#allocation6], 4
      %s30 = int_to_ptr.vmem [resolvable:$true] %s29
      %32 = dma.hbm_to_vmem [thread:$0]  %s28, 128, %s30, [#allocation7]
    $region17: #{tpu_custom_call.1} parent=1 // pred_fallthru
      _
    // Predicated region
    $region18: #{tpu_custom_call.1} parent=1 // pred_check
      _
    $region19: #{tpu_custom_call.1} parent=1 // pred_check_branch
      %34 = sbr.rel (0) target = $region21
    $region20: #{tpu_custom_call.1} parent=1 // pred_region
      %36 = dma.done [#allocation7], 128
    $region21: #{tpu_custom_call.1} parent=1 // pred_fallthru
      _
    %s37 = smul.u32 0, 16
    %p38 = scmp.eq.s32.totalorder 0, 0
    // Predicated region
    $region22: #{tpu_custom_call.1} parent=1 // pred_check
      %p39 = pneg %p38
    $region23: #{tpu_custom_call.1} parent=1 // pred_check_branch
      %41 = sbr.rel (%p39) target = $region25
    $region24: #{tpu_custom_call.1} parent=1 // pred_region
      %vm42 = vcmask 7168
      %43 = vst.msk [vmem:[#allocation2] sm:$0xff] %vm42, -inf
      %44 = vst.msk [vmem:[#allocation3] sm:$0xff] %vm42, 0.0
      %45 = vst.msk [vmem:[#allocation4] sm:$0xff] %vm42, 0.0
      %46 = vst.msk [vmem:[#allocation5] sm:$0xff] %vm42, 0.0
    $region25: #{tpu_custom_call.1} parent=1 // pred_fallthru
      _
    %p47 = scmp.eq.s32.totalorder 0, 0
    %p48 = pnand %p38, %p47
    %p49 = pneg %p48
    // Predicated region
    $region26: #{tpu_custom_call.1} parent=1 // pred_check
      _
    $region27: #{tpu_custom_call.1} parent=1 // pred_check_branch
      %51 = sbr.rel (%p48) target = $region29
    $region28: #{tpu_custom_call.1} parent=1 // pred_region
      %v52 = vld [vmem:[%s0] sm:$0xff]
      %v53 = vmul.f32 %v52, %v52
      %vm54 = vcmask 261120
      %v55 = vsel %vm54, %v53, 0.0
      %56 = vadd.xlane.f32.xlu0 %v55
      %v57 = vpop.xlane.xlu0 %56
      %v58 = vadd.f32 %v57, 1e-24
      %v59 = vrsqrt.pop %v58
      %v60 = vmul.f32 %v59, %v58
      %v61 = vmul.f32 %v60, %v59
      %v62 = vmul.f32 0.5, %v61
      %v63 = vsub.f32 1.5, %v62
      %v64 = vmul.f32 %v59, %v63
      %vm65 = vweird.f32 %v58
      %vm66 = vweird.f32 %v59
      %vm67 = vmor %vm65, %vm66
      %v68 = vsel %vm67, %v59, %v64
      %v69 = vmul.f32 %v52, %v68
      %v71 = vsel %vm54, %v69, 0
      %73 = vmatpush.xpose.msra.mxu0 0.0
      %74 = vmatpush.xpose.msra.mxu0 0.0
      %75 = vmatpush.xpose.msra.mxu0 0.0
      %76 = vmatpush.xpose.msra.mxu0 0.0
      %77 = vmatpush.xpose.msra.mxu0 0.0
      %78 = vmatpush.xpose.msra.mxu0 0.0
      %79 = vmatpush.xpose.msra.mxu0 0.0
      %80 = vmatpush.xpose.msra.mxu0 0.0
      %81 = vmatpush.xpose.msra.mxu0 0.0
      %82 = vmatpush.xpose.msra.mxu0 0.0
      %83 = vmatpush.xpose.msra.mxu0 0.0
      %84 = vmatpush.xpose.msra.mxu0 0.0
      %85 = vmatpush.xpose.msra.mxu0 0.0
      %86 = vmatpush.xpose.msra.mxu0 0.0
      %87 = vmatpush.xpose.msra.mxu0 0.0
      %88 = vmatpush.xpose.msra.mxu0 %v71
      %89 = vmatmul.f32.gmra.mxu0 %v71
      %v90 = vpop.f32.mrf.mxu0
      %v91 = vadd.f32 0.0, %v90
      %92 = vdwg.mxu0
      %v93 = vmul.f32 %v91, 2.0
      %v94 = vsub.f32 2.0, %v93
      %v95 = vmax.f32 %v94, 1e-12
      %v96 = vrsqrt.pop %v95
      %v97 = vmul.f32 %v96, %v95
      %v98 = vmul.f32 %v97, %v96
      %v99 = vmul.f32 0.5, %v98
      %v100 = vsub.f32 1.5, %v99
      %v101 = vmul.f32 %v96, %v100
      %v102 = vmul.f32 %v95, %v101
      %vm103 = vcmp.eq.f32.partialorder %v95, inf
      %v104 = vsel %vm103, %v95, %v102
      %vm105 = vcmp.eq.f32.partialorder %v95, 0.0
      %v106 = vand.u32 %v95, 2147483648
      %v107 = vsel %vm105, %v106, %v104
      %v108 = vld [vmem:[%s2] sm:$0xff]
      %v109 = vld [vmem:[%s1] sm:$0x1]
      %110 = vset.pattern.permute.xlu0 0
      %111 = vperm.xlu0 %110, %v108
      %v112 = vpop.permute.xlu0 %111
      %v113 = vperm.slane %v109, 0
      %vm114 = vcmp.eq.s32.totalorder %v112, %v113
      %v115 = vsel %vm114, %v107, -inf
      %vm116 = vcmask 64512
      %v117 = vsel %vm116, %v115, -inf
      %118 = vmax.xlane.f32.xlu0 %v117
      %v119 = vpop.xlane.xlu0 %118
      %v120 = vsel %vm114, inf, %v107
      %v121 = vsel %vm116, %v120, inf
      %122 = vmin.xlane.f32.xlu0 %v121
      %v123 = vpop.xlane.xlu0 %122
      %v124 = vsub.f32 %v119, %v123
      %v125 = vadd.f32 %v124, 0.3
      %v126 = vmax.f32 %v125, 0.0
      %v127 = vrot.slane %v126, 4
      %v128 = vadd.f32 %v126, %v127
      %v129 = vrot.slane %v128, 2
      %v130 = vadd.f32 %v128, %v129
      %v131 = vrot.slane %v130, 1
      %v132 = vadd.f32 %v130, %v131
      %v133 = vrcp.pop 8.0
      %v134 = vmul.f32 8.0, %v133
      %v135 = vsub.f32 1.0, %v134
      %v136 = vmul.f32 %v133, %v135
      %v137 = vadd.f32 %v133, %v136
      %vm138 = vweird.f32 %v133
      %v139 = vsel %vm138, %v133, %v137
      %v140 = vmul.f32 %v132, %v139
      %vm141 = vcmask 0
      %142 = vst.msk [vmem:[#allocation9] sm:$0x1] %vm141, %v140
    $region29: #{tpu_custom_call.1} parent=1 // pred_fallthru
      _
    %p143 = scmp.gt.s32.totalorder 0, 0
    %p144 = pnand %p38, %p143
    %p145 = pneg %p144
    // Predicated region
    $region30: #{tpu_custom_call.1} parent=1 // pred_check
      _
    $region31: #{tpu_custom_call.1} parent=1 // pred_check_branch
      %147 = sbr.rel (%p144) target = $region33
    $region32: #{tpu_custom_call.1} parent=1 // pred_region
      %vm148 = vcmask 0
      %149 = vst.msk [vmem:[#allocation9] sm:$0x1] %vm148, 0.0
    $region33: #{tpu_custom_call.1} parent=1 // pred_fallthru
      _
    %v150 = vld [vmem:[#allocation6] sm:$0xff]
    %v151 = vlaneseq
    %v152 = vand.u32 %v151, 127
    %v153 = vld [vmem:[%s2] sm:$0xff]
    %v154 = vstv %s37
    %v155 = vsub.s32 %v153, %v154
    %156 = vset.pattern.permute.xlu0 0
    %157 = vperm.xlu0 %156, %v155
    %v158 = vpop.permute.xlu0 %157
    %vm159 = vcmp.eq.s32.totalorder %v152, %v158
    %v160 = vld [vmem:[#allocation2] sm:$0xff]
    %vm161 = vcmask 130048
    %v162 = vsel %vm161, %v150, -inf
    %163 = vmax.xlane.f32.xlu0 %v162
    %v164 = vpop.xlane.xlu0 %163
    %v165 = vmax.f32 %v160, %v164
    %v166 = vsub.f32 %v160, %v165
    %v167 = vmul.f32 %v166, 1.442695
    %v168 = vpow.pop %v167
    %170 = vset.pattern.permute.xlu0 0
    %171 = vperm.xlu0 %170, %v165
    %v172 = vpop.permute.xlu0 %171
    %v174 = vsub.f32 %v150, %v172
    %v175 = vmul.f32 %v174, 1.442695
    %v176 = vpow.pop %v175
    %v177 = vld [vmem:[#allocation3] sm:$0xff]
    %v178 = vmul.f32 %v177, %v168
    %v179 = vsel %vm161, %v176, 0.0
    %180 = vadd.xlane.f32.xlu0 %v179
    %v181 = vpop.xlane.xlu0 %180
    %v182 = vadd.f32 %v178, %v181
    %vm183 = vcmask 7168
    %184 = vst.msk [vmem:[#allocation3] sm:$0xff] %vm183, %v182
    %185 = vst.msk [vmem:[#allocation2] sm:$0xff] %vm183, %v165
    %v186 = vld [vmem:[#allocation4] sm:$0xff]
    %v187 = vsel %vm161, %v150, 0.0
    %188 = vadd.xlane.f32.xlu0 %v187
    %v189 = vpop.xlane.xlu0 %188
    %v190 = vadd.f32 %v186, %v189
    %191 = vst.msk [vmem:[#allocation4] sm:$0xff] %vm183, %v190
    %v192 = vld [vmem:[#allocation5] sm:$0xff]
    %v193 = vsel %vm159, %v150, 0.0
    %v194 = vsel %vm161, %v193, 0.0
    %195 = vadd.xlane.f32.xlu0 %v194
    %v196 = vpop.xlane.xlu0 %195
    %v197 = vadd.f32 %v192, %v196
    %198 = vst.msk [vmem:[#allocation5] sm:$0xff] %vm183, %v197
    // Predicated region
    $region34: #{tpu_custom_call.1} parent=1 // pred_check
      %p199 = pneg %p38
    $region35: #{tpu_custom_call.1} parent=1 // pred_check_branch
      %201 = sbr.rel (%p199) target = $region37
    $region36: #{tpu_custom_call.1} parent=1 // pred_region
      %v202 = vld [vmem:[#allocation2] sm:$0xff]
      %203 = vst.msk [vmem:[%s5] sm:$0xff] %vm183, %v202
      %v204 = vld [vmem:[#allocation3] sm:$0xff]
      %205 = vst.msk [vmem:[%s6] sm:$0xff] %vm183, %v204
      %v206 = vld [vmem:[#allocation4] sm:$0xff]
      %207 = vst.msk [vmem:[%s7] sm:$0xff] %vm183, %v206
      %v208 = vld [vmem:[#allocation5] sm:$0xff]
      %209 = vst.msk [vmem:[%s8] sm:$0xff] %vm183, %v208
    $region37: #{tpu_custom_call.1} parent=1 // pred_fallthru
      _
    // Predicated region
    $region38: #{tpu_custom_call.1} parent=1 // pred_check
      _
    $region39: #{tpu_custom_call.1} parent=1 // pred_check_branch
      %211 = sbr.rel (0) target = $region41
    $region40: #{tpu_custom_call.1} parent=1 // pred_region
      %213 = vsyncadd [#allocation8], 0
      %s215 = sshll.u32 [#allocation9], 4
      %s216 = int_to_ptr.vmem [resolvable:$true] %s215
      %s217 = sshll.u32 %s4, 4
      %s218 = int_to_ptr.hbm [resolvable:$true] %s217
      %220 = dma.vmem_to_hbm [thread:$0]  %s216, 16, %s218, [#allocation8]
    $region41: #{tpu_custom_call.1} parent=1 // pred_fallthru
      _
    // Predicated region
    $region42: #{tpu_custom_call.1} parent=1 // pred_check
      _
    $region43: #{tpu_custom_call.1} parent=1 // pred_check_branch
      %222 = sbr.rel (0) target = $region45
    $region44: #{tpu_custom_call.1} parent=1 // pred_region
      _
    $region45: #{tpu_custom_call.1} parent=1 // pred_fallthru
      _
    // Predicated region
    $region46: #{tpu_custom_call.1} parent=1 // pred_check
      _
    $region47: #{tpu_custom_call.1} parent=1 // pred_check_branch
      %224 = sbr.rel (0) target = $region49
    $region48: #{tpu_custom_call.1} parent=1 // pred_region
      _
    $region49: #{tpu_custom_call.1} parent=1 // pred_fallthru
      _
    // Predicated region
    $region50: #{tpu_custom_call.1} parent=1 // pred_check
      _
    $region51: #{tpu_custom_call.1} parent=1 // pred_check_branch
      %226 = sbr.rel (0) target = $region53
    $region52: #{tpu_custom_call.1} parent=1 // pred_region
      _
    $region53: #{tpu_custom_call.1} parent=1 // pred_fallthru
      _
    // Predicated region
    $region54: #{tpu_custom_call.1} parent=1 // pred_check
      _
    $region55: #{tpu_custom_call.1} parent=1 // pred_check_branch
      %228 = sbr.rel (0) target = $region57
    $region56: #{tpu_custom_call.1} parent=1 // pred_region
      _
    $region57: #{tpu_custom_call.1} parent=1 // pred_fallthru
      _
    // Predicated region
    $region58: #{tpu_custom_call.1} parent=1 // pred_check
      _
    $region59: #{tpu_custom_call.1} parent=1 // pred_check_branch
      %230 = sbr.rel (0) target = $region61
    $region60: #{tpu_custom_call.1} parent=1 // pred_region
      %232 = dma.done [#allocation8], 16
    $region61: #{tpu_custom_call.1} parent=1 // pred_fallthru
      _
    // Predicated region
    $region62: #{tpu_custom_call.1} parent=1 // pred_check
      _
    $region63: #{tpu_custom_call.1} parent=1 // pred_check_branch
      %234 = sbr.rel (0) target = $region65
    $region64: #{tpu_custom_call.1} parent=1 // pred_region
      _
    $region65: #{tpu_custom_call.1} parent=1 // pred_fallthru
      _
    // Predicated region
    $region66: #{tpu_custom_call.1} parent=1 // pred_check
      _
    $region67: #{tpu_custom_call.1} parent=1 // pred_check_branch
      %236 = sbr.rel (0) target = $region69
    $region68: #{tpu_custom_call.1} parent=1 // pred_region
      _
    $region69: #{tpu_custom_call.1} parent=1 // pred_fallthru
      _
    // Predicated region
    $region70: #{tpu_custom_call.1} parent=1 // pred_check
      _
    $region71: #{tpu_custom_call.1} parent=1 // pred_check_branch
      %238 = sbr.rel (0) target = $region73
    $region72: #{tpu_custom_call.1} parent=1 // pred_region
      _
    $region73: #{tpu_custom_call.1} parent=1 // pred_fallthru
      _
    // Predicated region
    $region74: #{tpu_custom_call.1} parent=1 // pred_check
      _
    $region75: #{tpu_custom_call.1} parent=1 // pred_check_branch
      %240 = sbr.rel (0) target = $region77
    $region76: #{tpu_custom_call.1} parent=1 // pred_region
      _
    $region77: #{tpu_custom_call.1} parent=1 // pred_fallthru
      _
    %241 = vsyncpa [#allocation7], 1
    %242 = vsyncpa [#allocation8], 1

</llo_original>
